<compile_context>
chip_gen: v7x
topology: tpu7x:2x2x1
jax: 0.10.0
libtpu: 0.0.40
codegen_flags: <defaults>
</compile_context>

<pallas_src>
import functools
import math

import jax
import jax.numpy as jnp
from jax.experimental import pallas as pl
from jax.experimental.pallas import tpu as pltpu


def _attn_kernel(q_ref, k_ref, v_ref, o_ref, acc_ref, m_ref, l_ref, *,
                 heads, ch, scale, approx_recip):
    kv = pl.program_id(2)

    @pl.when(kv == 0)
    def _():
        m_ref[...] = jnp.full(m_ref.shape, -jnp.inf, dtype=m_ref.dtype)
        l_ref[...] = jnp.zeros(l_ref.shape, dtype=l_ref.dtype)
        acc_ref[...] = jnp.zeros(acc_ref.shape, dtype=acc_ref.dtype)

    # `heads` is 1 whenever ch is sublane-aligned (the common case), so only a
    # single head's (Tk, Lq) score/prob tiles are live per step.
    for h in range(heads):
        lo, hi = h * ch, (h + 1) * ch
        # Pre-scale q by 1/sqrt(ch): O(ch*Lq) multiplies instead of O(Tk*Lq).
        # Done in the input dtype; the bf16 mantissa loss is negligible here.
        q = q_ref[0, lo:hi, :] * scale                   # (ch, Lq)
        k = k_ref[0, lo:hi, :]                           # (ch, Tk)
        v = v_ref[0, lo:hi, :]                           # (ch, Tk)

        # Transposed-score orientation: s_T[j, i] = sum_c k[c, j] * q[c, i].
        # Only the small (ch, Tk) lhs is MXU-transposed; softmax reductions run
        # along sublanes; the PV matmul below is canonical (no (L,L) vxpose).
        s_t = jax.lax.dot_general(k, q, (((0,), (0,)), ((), ())),
                                  preferred_element_type=jnp.float32)  # (Tk, Lq)

        m_prev = m_ref[h:h + 1, :]                                     # (1, Lq)
        m_new = jnp.maximum(m_prev, jnp.max(s_t, axis=0, keepdims=True))
        alpha = jnp.exp(m_prev - m_new)                                # (1, Lq)
        p_t = jnp.exp(s_t - m_new)                   # (Tk, Lq), un-normalized
        l_ref[h:h + 1, :] = (alpha * l_ref[h:h + 1, :]
                             + jnp.sum(p_t, axis=0, keepdims=True))
        # TODO(synk): if the bundle dump shows XLU/VPU as the binding slot
        # (v6e/v7x), fold the row-sum above into the PV matmul by appending a
        # ones row to v (MXU has slack since ch << contraction depth).
        pv = jax.lax.dot_general(v, p_t.astype(v_ref.dtype),
                                 (((1,), (0,)), ((), ())),
                                 preferred_element_type=jnp.float32)   # (ch, Lq)
        acc_ref[lo:hi, :] = alpha * acc_ref[lo:hi, :] + pv
        m_ref[h:h + 1, :] = m_new

    @pl.when(kv == pl.num_programs(2) - 1)
    def _():
        for h in range(heads):
            lo, hi = h * ch, (h + 1) * ch
            denom = l_ref[h:h + 1, :]
            if approx_recip:
                # Deferred normalization on the (ch, Lq) accumulator; the
                # reciprocal goes to the EUP slot (essentially free).
                norm = acc_ref[lo:hi, :] * pl.reciprocal(denom, approx=True)
            else:
                norm = acc_ref[lo:hi, :] / denom
            o_ref[0, lo:hi, :] = norm.astype(o_ref.dtype)


def _sublane_tile(dtype):
    return {4: 8, 2: 16, 1: 32}.get(jnp.dtype(dtype).itemsize, 8)


def _heads_per_block(n_heads, ch, dtype):
    """Smallest head grouping whose sublane extent is dtype-tile aligned."""
    tile = _sublane_tile(dtype)
    for hb in range(1, n_heads + 1):
        if n_heads % hb == 0 and (hb * ch) % tile == 0:
            return hb
    # TODO(synk): no aligned grouping exists (ch not a multiple of the dtype
    # tile even with all heads grouped); accept masked/padded loads.
    return n_heads


def _vmem_limits():
    cap = 64 * 1024 * 1024
    try:
        cap = int(getattr(pltpu.get_tpu_info(), "vmem_capacity_bytes", cap))
    except Exception:
        pass
    # ~3/4 of physical VMEM (v5e/v6e: 96 MiB, v7x: 48 MiB); the tiling budget
    # below keeps further headroom for double-buffering and compiler temps.
    limit = min((cap * 3) // 4, 112 * 1024 * 1024)
    budget = (limit * 4) // 5
    return limit, budget


def _per_step_bytes(blk, hb, length, tk, itemsize):
    io = 2 * itemsize * blk * (length + 2 * tk)    # q + k + v blocks, double-buffered
    out = 2 * itemsize * blk * length              # resident output block
    scratch = 4 * blk * length + 2 * 4 * max(hb, 8) * length   # acc + m + l (f32)
    temps = tk * length * (8 + itemsize)           # s_t(f32) + p_t(f32) + cast copy
    return io + out + scratch + temps


def _key_tile(length, blk, hb, itemsize, budget):
    """Largest key tile (multiple of 128, or the full length) within budget."""
    cands = sorted({length} | {t for t in range(128, length, 128)
                               if length % t == 0}, reverse=True)
    for tk in cands:
        if _per_step_bytes(blk, hb, length, tk, itemsize) <= budget:
            return tk
    return cands[-1]


def qkv_attention(qkv: jax.Array, n_heads: int, *,
                  approx_reciprocal: bool = True) -> jax.Array:
    """Pallas TPU implementation of QKVAttention.forward.

    qkv: (bs, width, length), width % (3 * n_heads) == 0.
    returns: (bs, n_heads * ch, length) with ch = width // (3 * n_heads).
    approx_reciprocal: use the EUP approximate reciprocal for the softmax
      normalization (rows sum to 1 only to ~1e-3 relative accuracy).
    """
    bs, width, length = qkv.shape
    assert width % (3 * n_heads) == 0
    ch = width // (3 * n_heads)
    itemsize = jnp.dtype(qkv.dtype).itemsize

    hb = _heads_per_block(n_heads, ch, qkv.dtype)   # heads per grid step (usually 1)
    hg = n_heads // hb                              # head groups per batch
    blk = hb * ch                                   # width-axis block size

    vmem_limit, vmem_budget = _vmem_limits()
    tk = _key_tile(length, blk, hb, itemsize, vmem_budget)
    n_kv = length // tk

    # q occupies width blocks [0, hg), k [hg, 2*hg), v [2*hg, 3*hg).
    q_spec = pl.BlockSpec((1, blk, length), lambda b, g, kv: (b, g, 0))
    k_spec = pl.BlockSpec((1, blk, tk), lambda b, g, kv: (b, hg + g, kv))
    v_spec = pl.BlockSpec((1, blk, tk), lambda b, g, kv: (b, 2 * hg + g, kv))
    o_spec = pl.BlockSpec((1, blk, length), lambda b, g, kv: (b, g, 0))

    flops = 4 * bs * n_heads * length * length * ch       # QK^T + PV
    transcendentals = bs * n_heads * length * length      # exp
    bytes_accessed = (bs * width * length
                      + bs * n_heads * ch * length) * itemsize

    kernel = functools.partial(_attn_kernel, heads=hb, ch=ch,
                               scale=1.0 / math.sqrt(ch),
                               approx_recip=approx_reciprocal)
    return pl.pallas_call(
        kernel,
        out_shape=jax.ShapeDtypeStruct((bs, n_heads * ch, length), qkv.dtype),
        grid_spec=pltpu.PrefetchScalarGridSpec(
            num_scalar_prefetch=0,
            grid=(bs, hg, n_kv),
            in_specs=[q_spec, k_spec, v_spec],
            out_specs=o_spec,
            scratch_shapes=[pltpu.VMEM((blk, length), jnp.float32),   # acc
                            pltpu.VMEM((hb, length), jnp.float32),    # running max
                            pltpu.VMEM((hb, length), jnp.float32)],   # running sum
        ),
        compiler_params=pltpu.CompilerParams(
            dimension_semantics=("parallel", "parallel", "arbitrary"),
            vmem_limit_bytes=vmem_limit,
        ),
        cost_estimate=pl.CostEstimate(
            flops=flops,
            transcendentals=transcendentals,
            bytes_accessed=bytes_accessed,
        ),
    )(qkv, qkv, qkv)


def _reference(qkv: jax.Array, n_heads: int) -> jax.Array:
    """Pure-JAX reference mirroring the PyTorch forward."""
    bs, width, length = qkv.shape
    ch = width // (3 * n_heads)
    q, k, v = jnp.split(qkv, 3, axis=1)

    def prep(x):
        return x.reshape(bs, n_heads, ch, length).transpose(0, 1, 3, 2)

    qh, kh, vh = prep(q), prep(k), prep(v)                    # (bs, h, L, C)
    s = jnp.einsum('bhqc,bhkc->bhqk', qh, kh) / math.sqrt(ch)
    p = jax.nn.softmax(s, axis=-1)
    o = jnp.einsum('bhqk,bhkc->bhqc', p, vh)                  # (bs, h, L, C)
    return o.transpose(0, 1, 3, 2).reshape(bs, -1, length)


if __name__ == "__main__":
    n_heads = 2
    bs, ch, length = 2, 8, 16
    width = 3 * n_heads * ch                                  # = 48

    key = jax.random.PRNGKey(0)
    qkv = jax.random.normal(key, (bs, width, length), dtype=jnp.float32)

    out = qkv_attention(qkv, n_heads)
    out = jax.block_until_ready(out)

    ref = _reference(qkv, n_heads)
    assert out.shape == (bs, n_heads * ch, length), out.shape
    # Tolerance accounts for the approximate (EUP) reciprocal used for the
    # softmax normalization and mixed-precision MXU accumulation.
    assert jnp.allclose(out, ref, atol=1e-2, rtol=1e-2), float(
        jnp.max(jnp.abs(out - ref)))

    print("KERNEL_OK")
</pallas_src>

<mosaic_0001>
module attributes {stable_mosaic.version = 11 : i64} {
  func.func @_attn_kernel(%arg0: i32, %arg1: i32, %arg2: i32, %arg3: memref<1x8x16xf32, #tpu.memory_space<vmem>>, %arg4: memref<1x8x16xf32, #tpu.memory_space<vmem>>, %arg5: memref<1x8x16xf32, #tpu.memory_space<vmem>>, %arg6: memref<1x8x16xf32, #tpu.memory_space<vmem>>, %arg7: memref<8x16xf32, #tpu.memory_space<vmem>>, %arg8: memref<1x16xf32, #tpu.memory_space<vmem>>, %arg9: memref<1x16xf32, #tpu.memory_space<vmem>>) attributes {dimension_semantics = [#tpu.dimension_semantics<parallel>, #tpu.dimension_semantics<parallel>, #tpu.dimension_semantics<arbitrary>], iteration_bounds = array<i64: 2, 2, 1>, scalar_prefetch = 0 : i64, scratch_operands = 3 : i64, tpu.core_type = #tpu.core_type<tc>, window_params = [{transform_indices = @transform_0, window_bounds = array<i64: 1, 8, 16>}, {transform_indices = @transform_1, window_bounds = array<i64: 1, 8, 16>}, {transform_indices = @transform_2, window_bounds = array<i64: 1, 8, 16>}, {transform_indices = @transform_3, window_bounds = array<i64: 1, 8, 16>}]} {
    %c0_i32 = arith.constant 0 : i32
    %0 = arith.cmpi eq, %arg2, %c0_i32 : i32
    %1 = arith.extui %0 : i1 to i32
    %c0_i32_0 = arith.constant 0 : i32
    %2 = arith.cmpi ne, %1, %c0_i32_0 : i32
    scf.if %2 {
      %cst_27 = arith.constant 0xFF800000 : f32
      %37 = vector.broadcast %cst_27 : f32 to vector<1x16xf32>
      %c0_28 = arith.constant 0 : index
      %c0_29 = arith.constant 0 : index
      %38 = vector.load %arg8[%c0_28, %c0_29] : memref<1x16xf32, #tpu.memory_space<vmem>>, vector<1x16xf32>
      tpu.vector_store %arg8[%c0_28, %c0_29], %37 {strides = array<i32>} : memref<1x16xf32, #tpu.memory_space<vmem>>, vector<1x16xf32>,
      %cst_30 = arith.constant 0.000000e+00 : f32
      %39 = vector.broadcast %cst_30 : f32 to vector<1x16xf32>
      %c0_31 = arith.constant 0 : index
      %c0_32 = arith.constant 0 : index
      %40 = vector.load %arg9[%c0_31, %c0_32] : memref<1x16xf32, #tpu.memory_space<vmem>>, vector<1x16xf32>
      tpu.vector_store %arg9[%c0_31, %c0_32], %39 {strides = array<i32>} : memref<1x16xf32, #tpu.memory_space<vmem>>, vector<1x16xf32>,
      %cst_33 = arith.constant 0.000000e+00 : f32
      %41 = vector.broadcast %cst_33 : f32 to vector<8x16xf32>
      %c0_34 = arith.constant 0 : index
      %c0_35 = arith.constant 0 : index
      %42 = vector.load %arg7[%c0_34, %c0_35] : memref<8x16xf32, #tpu.memory_space<vmem>>, vector<8x16xf32>
      tpu.vector_store %arg7[%c0_34, %c0_35], %41 {strides = array<i32>} : memref<8x16xf32, #tpu.memory_space<vmem>>, vector<8x16xf32>,
    } else {
    }
    %c0 = arith.constant 0 : index
    %c0_1 = arith.constant 0 : index
    %c0_2 = arith.constant 0 : index
    %3 = vector.load %arg3[%c0, %c0_1, %c0_2] : memref<1x8x16xf32, #tpu.memory_space<vmem>>, vector<1x8x16xf32>
    %4 = vector.shape_cast %3 : vector<1x8x16xf32> to vector<8x16xf32>
    %cst = arith.constant 0.353553385 : f32
    %5 = vector.broadcast %cst : f32 to vector<8x16xf32>
    %6 = arith.mulf %4, %5 : vector<8x16xf32>
    %c0_3 = arith.constant 0 : index
    %c0_4 = arith.constant 0 : index
    %c0_5 = arith.constant 0 : index
    %7 = vector.load %arg4[%c0_3, %c0_4, %c0_5] : memref<1x8x16xf32, #tpu.memory_space<vmem>>, vector<1x8x16xf32>
    %8 = vector.shape_cast %7 : vector<1x8x16xf32> to vector<8x16xf32>
    %c0_6 = arith.constant 0 : index
    %c0_7 = arith.constant 0 : index
    %c0_8 = arith.constant 0 : index
    %9 = vector.load %arg5[%c0_6, %c0_7, %c0_8] : memref<1x8x16xf32, #tpu.memory_space<vmem>>, vector<1x8x16xf32>
    %10 = vector.shape_cast %9 : vector<1x8x16xf32> to vector<8x16xf32>
    %cst_9 = arith.constant dense<0.000000e+00> : vector<16x16xf32>
    %11 = tpu.matmul %8, %6, %cst_9 {dimension_numbers = #tpu.dot_dimension_numbers<[0], [0], [1], [1], [0, 1, 1, 1], [], []>} : vector<8x16xf32>, vector<8x16xf32>, vector<16x16xf32> -> vector<16x16xf32>
    %c0_10 = arith.constant 0 : index
    %c0_11 = arith.constant 0 : index
    %12 = vector.load %arg8[%c0_10, %c0_11] : memref<1x16xf32, #tpu.memory_space<vmem>>, vector<1x16xf32>
    %cst_12 = arith.constant dense<0xFF800000> : vector<16xf32>
    %13 = vector.multi_reduction <maximumf>, %11, %cst_12 [0] : vector<16x16xf32> to vector<16xf32>
    %14 = vector.shape_cast %13 : vector<16xf32> to vector<1x16xf32>
    %15 = arith.maximumf %12, %14 : vector<1x16xf32>
    %16 = arith.subf %12, %15 : vector<1x16xf32>
    %17 = math.exp %16 : vector<1x16xf32>
    %18 = vector.broadcast %15 : vector<1x16xf32> to vector<16x16xf32>
    %19 = arith.subf %11, %18 : vector<16x16xf32>
    %20 = math.exp %19 : vector<16x16xf32>
    %c0_13 = arith.constant 0 : index
    %c0_14 = arith.constant 0 : index
    %21 = vector.load %arg9[%c0_13, %c0_14] : memref<1x16xf32, #tpu.memory_space<vmem>>, vector<1x16xf32>
    %22 = arith.mulf %17, %21 : vector<1x16xf32>
    %cst_15 = arith.constant dense<0.000000e+00> : vector<16xf32>
    %23 = vector.multi_reduction <add>, %20, %cst_15 [0] : vector<16x16xf32> to vector<16xf32>
    %24 = vector.shape_cast %23 : vector<16xf32> to vector<1x16xf32>
    %25 = arith.addf %22, %24 : vector<1x16xf32>
    %c0_16 = arith.constant 0 : index
    %c0_17 = arith.constant 0 : index
    %26 = vector.load %arg9[%c0_16, %c0_17] : memref<1x16xf32, #tpu.memory_space<vmem>>, vector<1x16xf32>
    tpu.vector_store %arg9[%c0_16, %c0_17], %25 {strides = array<i32>} : memref<1x16xf32, #tpu.memory_space<vmem>>, vector<1x16xf32>,
    %cst_18 = arith.constant dense<0.000000e+00> : vector<8x16xf32>
    %27 = tpu.matmul %10, %20, %cst_18 {dimension_numbers = #tpu.dot_dimension_numbers<[1], [0], [0], [1], [0, 0, 1, 1], [], []>} : vector<8x16xf32>, vector<16x16xf32>, vector<8x16xf32> -> vector<8x16xf32>
    %c0_19 = arith.constant 0 : index
    %c0_20 = arith.constant 0 : index
    %28 = vector.load %arg7[%c0_19, %c0_20] : memref<8x16xf32, #tpu.memory_space<vmem>>, vector<8x16xf32>
    %29 = vector.broadcast %17 : vector<1x16xf32> to vector<8x16xf32>
    %30 = arith.mulf %29, %28 : vector<8x16xf32>
    %31 = arith.addf %30, %27 : vector<8x16xf32>
    %c0_21 = arith.constant 0 : index
    %c0_22 = arith.constant 0 : index
    %32 = vector.load %arg7[%c0_21, %c0_22] : memref<8x16xf32, #tpu.memory_space<vmem>>, vector<8x16xf32>
    tpu.vector_store %arg7[%c0_21, %c0_22], %31 {strides = array<i32>} : memref<8x16xf32, #tpu.memory_space<vmem>>, vector<8x16xf32>,
    %c0_23 = arith.constant 0 : index
    %c0_24 = arith.constant 0 : index
    %33 = vector.load %arg8[%c0_23, %c0_24] : memref<1x16xf32, #tpu.memory_space<vmem>>, vector<1x16xf32>
    tpu.vector_store %arg8[%c0_23, %c0_24], %15 {strides = array<i32>} : memref<1x16xf32, #tpu.memory_space<vmem>>, vector<1x16xf32>,
    %c0_i32_25 = arith.constant 0 : i32
    %34 = arith.cmpi eq, %arg2, %c0_i32_25 : i32
    %35 = arith.extui %34 : i1 to i32
    %c0_i32_26 = arith.constant 0 : i32
    %36 = arith.cmpi ne, %35, %c0_i32_26 : i32
    scf.if %36 {
      %c0_27 = arith.constant 0 : index
      %c0_28 = arith.constant 0 : index
      %37 = vector.load %arg9[%c0_27, %c0_28] : memref<1x16xf32, #tpu.memory_space<vmem>>, vector<1x16xf32>
      %c0_29 = arith.constant 0 : index
      %c0_30 = arith.constant 0 : index
      %38 = vector.load %arg7[%c0_29, %c0_30] : memref<8x16xf32, #tpu.memory_space<vmem>>, vector<8x16xf32>
      %39 = tpu.reciprocal %37 {approx = true} : vector<1x16xf32> -> vector<1x16xf32>
      %40 = vector.broadcast %39 : vector<1x16xf32> to vector<8x16xf32>
      %41 = arith.mulf %38, %40 : vector<8x16xf32>
      %c0_31 = arith.constant 0 : index
      %c0_32 = arith.constant 0 : index
      %c0_33 = arith.constant 0 : index
      %42 = vector.load %arg6[%c0_31, %c0_32, %c0_33] : memref<1x8x16xf32, #tpu.memory_space<vmem>>, vector<1x8x16xf32>
      %43 = vector.shape_cast %42 : vector<1x8x16xf32> to vector<8x16xf32>
      %44 = vector.shape_cast %41 : vector<8x16xf32> to vector<1x8x16xf32>
      tpu.vector_store %arg6[%c0_31, %c0_32, %c0_33], %44 {strides = array<i32>} : memref<1x8x16xf32, #tpu.memory_space<vmem>>, vector<1x8x16xf32>,
    } else {
    }
    return
  }
  func.func @transform_0(%arg0: i32, %arg1: i32, %arg2: i32) -> (i32, i32, i32) {
    %c0_i32 = arith.constant 0 : i32
    %c0_i32_0 = arith.constant 0 : i32
    return %arg0, %arg1, %c0_i32 : i32, i32, i32
  }
  func.func @transform_1(%arg0: i32, %arg1: i32, %arg2: i32) -> (i32, i32, i32) {
    %c2_i32 = arith.constant 2 : i32
    %0 = arith.addi %c2_i32, %arg1 : i32
    %c0_i32 = arith.constant 0 : i32
    return %arg0, %0, %arg2 : i32, i32, i32
  }
  func.func @transform_2(%arg0: i32, %arg1: i32, %arg2: i32) -> (i32, i32, i32) {
    %c4_i32 = arith.constant 4 : i32
    %0 = arith.addi %c4_i32, %arg1 : i32
    %c0_i32 = arith.constant 0 : i32
    return %arg0, %0, %arg2 : i32, i32, i32
  }
  func.func @transform_3(%arg0: i32, %arg1: i32, %arg2: i32) -> (i32, i32, i32) {
    %c0_i32 = arith.constant 0 : i32
    %c0_i32_0 = arith.constant 0 : i32
    return %arg0, %arg1, %c0_i32 : i32, i32, i32
  }
}

</mosaic_0001>

<llo_original>
// kernel: tpu_custom_call.1
$region0: #{tpu_custom_call.1}
  #allocation0 [shape = 'u32[]', space=smem, size = 0x4, offset = 0x4, fixed_abs, tag = 'smem constant byte address 0x4 - core index']
  #allocation1 [shape = 'u32[144,128]{1,0:T(1,128)}', space=vmem, size = 0x12000, scoped, tag = 'internal scratch']
  #allocation2 [shape = 'f32[8,16]{1,0:T(8,128)}', space=vmem, size = 0x1000, scoped, tag = 'scratch operand']
  #allocation3 [shape = 'f32[1,16]{1,0:T(1,128)}', space=vmem, size = 0x200, scoped, tag = 'scratch operand']
  #allocation4 [shape = 'f32[1,16]{1,0:T(1,128)}', space=vmem, size = 0x200, scoped, tag = 'scratch operand']
  %s0 = inlined_call_operand.vmem [shape: f32[2,48,16], index: 0, kind: input, shape index: {}]
  %s1 = inlined_call_operand.vmem [shape: f32[2,48,16], index: 1, kind: input, shape index: {}]
  %s2 = inlined_call_operand.vmem [shape: f32[2,48,16], index: 2, kind: input, shape index: {}]
  %s3 = inlined_call_operand.hbm [shape: f32[2,16,16], index: 3, kind: output, shape index: {}]
  %s4 = sld [smem:[#allocation0]]
  $region53: #{tpu_custom_call.1} parent=0
    _
  %s6 = ssub.s32 1, %s4
  %s7 = scalar_select 0, %s6, %s4
  $region1: #{tpu_custom_call.1} parent=0
    #allocation5 [shape = 'u8[8192]{0}', space=vmem, size = 0x2000, scoped, tag = 'output window, operand 0']
    #allocation6 [shape = 's32[2]{0}', space=sflag, size = 0x8, scoped, tag = 'scoped memory for tpu_custom_call.1']
    %8 = vsyncpa [#allocation6], 0
    %s9 = scalar_lea.sflag [#allocation6], 1
    %10 = vsyncpa %s9, 0
    loop: start=0, step=1, limit=6
    $region2: #{tpu_custom_call.1} parent=1 // loop_pre_header
      _
    $region3: #{tpu_custom_call.1} parent=1 // loop_header
      %s12 = sphi 0, %s16
      %p13 = scmp.ge.s32.totalorder %s12, 6
      %s19 = sphi 0, %s38
      %s20 = sphi 0, %s34
      %s21 = sphi 0, %s30
      %s22 = sphi 0, %s19
      %s23 = sphi 0, %s20
      %s24 = sphi 0, %s21
      %s25 = sphi 0, %s22
      %s26 = sphi 0, %s23
      %s27 = sphi 0, %s24
      %s43 = sphi 0, %s45
      %s46 = sphi 0, %s43
      %s47 = sphi 0, %s46
      %s63 = sphi 0, %s47
      %s75 = sphi 0, %s77
      %s78 = sphi 0, %s75
      %s79 = sphi 0, %s78
      %s95 = sphi 0, %s79
      %s107 = sphi 0, %s109
      %s110 = sphi 0, %s107
      %s111 = sphi 0, %s110
      %s127 = sphi 0, %s111
      %s135 = sphi 0, %s137
      %s138 = sphi 0, %s135
      %s139 = sphi 0, %s138
      %s155 = sphi 0, %s139
    $region4: #{tpu_custom_call.1} parent=1 // loop_header_branch
      %15 = sbr.rel (%p13) target = $region8
    $region5: #{tpu_custom_call.1} parent=1 // loop_body
      %s17 = ssub.s32 %s12, 1
      %s18 = ssub.s32 %s12, 2
      %s28 = sadd.s32 1, %s21
      %p29 = scmp.ge.s32.totalorder %s28, 1
      %s30 = scalar_select %p29, 0, %s28
      %s31 = sadd.s32 1, %s20
      %s32 = scalar_select %p29, %s31, %s20
      %p33 = scmp.ge.s32.totalorder %s32, 2
      %s34 = scalar_select %p33, 0, %s32
      %s35 = sadd.s32 1, %s19
      %s36 = scalar_select %p33, %s35, %s19
      %p37 = scmp.ge.s32.totalorder %s36, 2
      %s38 = scalar_select %p37, 0, %s36
      %s39 = ssub.s32 %s19, %s38
      %s40 = ssub.s32 %s20, %s34
      %s41 = sor.u32 %s39, %s40
      %p42 = scmp.eq.s32.totalorder %s41, 0
      %s44 = sadd.s32 %s43, 1
      %s45 = scalar_select %p42, %s43, %s44
      %p48 = pneg %p42
      %p49 = scmp.eq.s32.totalorder %s12, 3
      %p50 = por %p48, %p49
      %p51 = scmp.ne.s32.totalorder %s43, %s46
      %p52 = scmp.eq.s32.totalorder %s12, 0
      %p53 = por %p51, %p52
      %p54 = scmp.ne.s32.totalorder %s43, %s46
      %p55 = scmp.eq.s32.totalorder %s17, 3
      %p56 = por %p54, %p55
      %p57 = scmp.ne.s32.totalorder %s46, %s47
      %p58 = scmp.eq.s32.totalorder %s17, 0
      %p59 = por %p57, %p58
      %p60 = scmp.ne.s32.totalorder %s46, %s47
      %p61 = scmp.eq.s32.totalorder %s18, 3
      %p62 = por %p60, %p61
      %p64 = scmp.ne.s32.totalorder %s47, %s63
      %p65 = scmp.eq.s32.totalorder %s18, 0
      %p66 = por %p64, %p65
      %s67 = sadd.s32 %s20, 2
      %s68 = sadd.s32 %s34, 2
      %s69 = ssub.s32 %s19, %s38
      %s70 = ssub.s32 %s67, %s68
      %s71 = sor.u32 %s69, %s70
      %s72 = ssub.s32 %s21, %s30
      %s73 = sor.u32 %s71, %s72
      %p74 = scmp.eq.s32.totalorder %s73, 0
      %s76 = sadd.s32 %s75, 1
      %s77 = scalar_select %p74, %s75, %s76
      %p80 = pneg %p74
      %p81 = scmp.eq.s32.totalorder %s12, 3
      %p82 = por %p80, %p81
      %p83 = scmp.ne.s32.totalorder %s75, %s78
      %p84 = scmp.eq.s32.totalorder %s12, 0
      %p85 = por %p83, %p84
      %p86 = scmp.ne.s32.totalorder %s75, %s78
      %p87 = scmp.eq.s32.totalorder %s17, 3
      %p88 = por %p86, %p87
      %p89 = scmp.ne.s32.totalorder %s78, %s79
      %p90 = scmp.eq.s32.totalorder %s17, 0
      %p91 = por %p89, %p90
      %p92 = scmp.ne.s32.totalorder %s78, %s79
      %p93 = scmp.eq.s32.totalorder %s18, 3
      %p94 = por %p92, %p93
      %p96 = scmp.ne.s32.totalorder %s79, %s95
      %p97 = scmp.eq.s32.totalorder %s18, 0
      %p98 = por %p96, %p97
      %s99 = sadd.s32 %s20, 4
      %s100 = sadd.s32 %s34, 4
      %s101 = ssub.s32 %s19, %s38
      %s102 = ssub.s32 %s99, %s100
      %s103 = sor.u32 %s101, %s102
      %s104 = ssub.s32 %s21, %s30
      %s105 = sor.u32 %s103, %s104
      %p106 = scmp.eq.s32.totalorder %s105, 0
      %s108 = sadd.s32 %s107, 1
      %s109 = scalar_select %p106, %s107, %s108
      %p112 = pneg %p106
      %p113 = scmp.eq.s32.totalorder %s12, 3
      %p114 = por %p112, %p113
      %p115 = scmp.ne.s32.totalorder %s107, %s110
      %p116 = scmp.eq.s32.totalorder %s12, 0
      %p117 = por %p115, %p116
      %p118 = scmp.ne.s32.totalorder %s107, %s110
      %p119 = scmp.eq.s32.totalorder %s17, 3
      %p120 = por %p118, %p119
      %p121 = scmp.ne.s32.totalorder %s110, %s111
      %p122 = scmp.eq.s32.totalorder %s17, 0
      %p123 = por %p121, %p122
      %p124 = scmp.ne.s32.totalorder %s110, %s111
      %p125 = scmp.eq.s32.totalorder %s18, 3
      %p126 = por %p124, %p125
      %p128 = scmp.ne.s32.totalorder %s111, %s127
      %p129 = scmp.eq.s32.totalorder %s18, 0
      %p130 = por %p128, %p129
      %s131 = ssub.s32 %s19, %s38
      %s132 = ssub.s32 %s20, %s34
      %s133 = sor.u32 %s131, %s132
      %p134 = scmp.eq.s32.totalorder %s133, 0
      %s136 = sadd.s32 %s135, 1
      %s137 = scalar_select %p134, %s135, %s136
      %p140 = pneg %p134
      %p141 = scmp.eq.s32.totalorder %s12, 3
      %p142 = por %p140, %p141
      %p143 = scmp.ne.s32.totalorder %s135, %s138
      %p144 = scmp.eq.s32.totalorder %s12, 0
      %p145 = por %p143, %p144
      %p146 = scmp.ne.s32.totalorder %s135, %s138
      %p147 = scmp.eq.s32.totalorder %s17, 3
      %p148 = por %p146, %p147
      %p149 = scmp.ne.s32.totalorder %s138, %s139
      %p150 = scmp.eq.s32.totalorder %s17, 0
      %p151 = por %p149, %p150
      %p152 = scmp.ne.s32.totalorder %s138, %s139
      %p153 = scmp.eq.s32.totalorder %s18, 3
      %p154 = por %p152, %p153
      %p156 = scmp.ne.s32.totalorder %s139, %s155
      %p157 = scmp.eq.s32.totalorder %s18, 0
      %p158 = por %p156, %p157
      %p159 = scmp.le.s32.totalorder 1, %s12
      %p160 = scmp.lt.s32.totalorder %s12, 5
      %p161 = pnand %p159, %p160
      %p162 = pneg %p161
      // Predicated region
      $region9: #{tpu_custom_call.1} parent=5 // pred_check
        _
      $region10: #{tpu_custom_call.1} parent=5 // pred_check_branch
        %164 = sbr.rel (%p161) target = $region12
      $region11: #{tpu_custom_call.1} parent=5 // pred_region
        %s165 = ssub.s32 %s12, 1
      $region12: #{tpu_custom_call.1} parent=5 // pred_fallthru
        _
      %p166 = scmp.lt.s32.totalorder %s12, 4
      // Predicated region
      $region13: #{tpu_custom_call.1} parent=5 // pred_check
        %p167 = pneg %p166
      $region14: #{tpu_custom_call.1} parent=5 // pred_check_branch
        %169 = sbr.rel (%p167) target = $region16
      $region15: #{tpu_custom_call.1} parent=5 // pred_region
        // Predicated region
        $region17: #{tpu_custom_call.1} parent=15 // pred_check
          %p170 = pneg %p53
        $region18: #{tpu_custom_call.1} parent=15 // pred_check_branch
          %172 = sbr.rel (%p170) target = $region20
        $region19: #{tpu_custom_call.1} parent=15 // pred_region
          %p173 = scmp.lt.s32.totalorder %s19, 1
          %s174 = scalar_select %p173, %s19, 1
          %p175 = scmp.lt.s32.totalorder %s20, 5
          %s176 = scalar_select %p175, %s20, 5
          %s177 = smul.addr %s174, 6
          %s178 = sadd.s32 %s176, %s177
          %s179 = smul.addr %s178, 8
          %s180 = scalar_lea.vmem %s0, %s179
        $region20: #{tpu_custom_call.1} parent=15 // pred_fallthru
          _
        // Predicated region
        $region21: #{tpu_custom_call.1} parent=15 // pred_check
          %p181 = pneg %p85
        $region22: #{tpu_custom_call.1} parent=15 // pred_check_branch
          %183 = sbr.rel (%p181) target = $region24
        $region23: #{tpu_custom_call.1} parent=15 // pred_region
          %s184 = sadd.s32 %s20, 2
          %p185 = scmp.lt.s32.totalorder %s19, 1
          %s186 = scalar_select %p185, %s19, 1
          %p187 = scmp.lt.s32.totalorder %s184, 5
          %s188 = scalar_select %p187, %s184, 5
          %p189 = scmp.lt.s32.totalorder %s21, 0
          %s190 = scalar_select %p189, %s21, 0
          %s191 = sadd.s32 %s190, %s188
          %s192 = smul.addr %s186, 6
          %s193 = sadd.s32 %s191, %s192
          %s194 = smul.addr %s193, 8
          %s195 = scalar_lea.vmem %s1, %s194
          %s196 = sadd.s32 %s20, 2
        $region24: #{tpu_custom_call.1} parent=15 // pred_fallthru
          _
        // Predicated region
        $region25: #{tpu_custom_call.1} parent=15 // pred_check
          %p197 = pneg %p117
        $region26: #{tpu_custom_call.1} parent=15 // pred_check_branch
          %199 = sbr.rel (%p197) target = $region28
        $region27: #{tpu_custom_call.1} parent=15 // pred_region
          %s200 = sadd.s32 %s20, 4
          %p201 = scmp.lt.s32.totalorder %s19, 1
          %s202 = scalar_select %p201, %s19, 1
          %p203 = scmp.lt.s32.totalorder %s200, 5
          %s204 = scalar_select %p203, %s200, 5
          %p205 = scmp.lt.s32.totalorder %s21, 0
          %s206 = scalar_select %p205, %s21, 0
          %s207 = sadd.s32 %s206, %s204
          %s208 = smul.addr %s202, 6
          %s209 = sadd.s32 %s207, %s208
          %s210 = smul.addr %s209, 8
          %s211 = scalar_lea.vmem %s2, %s210
          %s212 = sadd.s32 %s20, 4
        $region28: #{tpu_custom_call.1} parent=15 // pred_fallthru
          _
      $region16: #{tpu_custom_call.1} parent=5 // pred_fallthru
        _
      %p213 = scmp.le.s32.totalorder 1, %s12
      %p214 = scmp.lt.s32.totalorder %s12, 5
      %p215 = pnand %p213, %p214
      %p216 = pneg %p215
      // Predicated region
      $region29: #{tpu_custom_call.1} parent=5 // pred_check
        _
      $region30: #{tpu_custom_call.1} parent=5 // pred_check_branch
        %218 = sbr.rel (%p215) target = $region32
      $region31: #{tpu_custom_call.1} parent=5 // pred_region
        %s219 = ssub.s32 %s12, 1
        %p220 = scmp.lt.s32.totalorder %s22, 1
        %s221 = scalar_select %p220, %s22, 1
        %p222 = scmp.lt.s32.totalorder %s23, 5
        %s223 = scalar_select %p222, %s23, 5
        %s224 = smul.addr %s221, 6
        %s225 = sadd.s32 %s223, %s224
        %s226 = smul.addr %s225, 8
        %s227 = scalar_lea.vmem %s0, %s226
        %p228 = pneg %p59
        %p229 = pneg %p56
        %s230 = sadd.s32 %s23, 2
        %p231 = scmp.lt.s32.totalorder %s22, 1
        %s232 = scalar_select %p231, %s22, 1
        %p233 = scmp.lt.s32.totalorder %s230, 5
        %s234 = scalar_select %p233, %s230, 5
        %p235 = scmp.lt.s32.totalorder %s24, 0
        %s236 = scalar_select %p235, %s24, 0
        %s237 = sadd.s32 %s236, %s234
        %s238 = smul.addr %s232, 6
        %s239 = sadd.s32 %s237, %s238
        %s240 = smul.addr %s239, 8
        %s241 = scalar_lea.vmem %s1, %s240
        %p242 = pneg %p91
        %p243 = pneg %p88
        %s244 = sadd.s32 %s23, 4
        %p245 = scmp.lt.s32.totalorder %s22, 1
        %s246 = scalar_select %p245, %s22, 1
        %p247 = scmp.lt.s32.totalorder %s244, 5
        %s248 = scalar_select %p247, %s244, 5
        %p249 = scmp.lt.s32.totalorder %s24, 0
        %s250 = scalar_select %p249, %s24, 0
        %s251 = sadd.s32 %s250, %s248
        %s252 = smul.addr %s246, 6
        %s253 = sadd.s32 %s251, %s252
        %s254 = smul.addr %s253, 8
        %s255 = scalar_lea.vmem %s2, %s254
        %p256 = pneg %p123
        %p257 = pneg %p120
        %p258 = pneg %p151
        %p259 = pneg %p148
        %s260 = sand.u32 %s138, 1
        %s261 = scalar_lea.sflag [#allocation6], %s260
        %s262 = sand.u32 %s138, 1
        %s263 = smul.addr %s262, 8
        %s264 = scalar_lea.vmem [#allocation5], %s263
        %p265 = scmp.lt.s32.totalorder %s22, 1
        %s266 = scalar_select %p265, %s22, 1
        %p267 = scmp.lt.s32.totalorder %s23, 5
        %s268 = scalar_select %p267, %s23, 5
        %s269 = smul.addr %s266, 6
        %s270 = sadd.s32 %s268, %s269
        %s271 = smul.addr %s270, 8
        %s272 = scalar_lea.vmem %s0, %s271
        %s273 = sadd.s32 %s23, 2
        %p274 = scmp.lt.s32.totalorder %s22, 1
        %s275 = scalar_select %p274, %s22, 1
        %p276 = scmp.lt.s32.totalorder %s273, 5
        %s277 = scalar_select %p276, %s273, 5
        %p278 = scmp.lt.s32.totalorder %s24, 0
        %s279 = scalar_select %p278, %s24, 0
        %s280 = sadd.s32 %s279, %s277
        %s281 = smul.addr %s275, 6
        %s282 = sadd.s32 %s280, %s281
        %s283 = smul.addr %s282, 8
        %s284 = scalar_lea.vmem %s1, %s283
        %s285 = sadd.s32 %s23, 2
        %s286 = sadd.s32 %s23, 4
        %p287 = scmp.lt.s32.totalorder %s22, 1
        %s288 = scalar_select %p287, %s22, 1
        %p289 = scmp.lt.s32.totalorder %s286, 5
        %s290 = scalar_select %p289, %s286, 5
        %p291 = scmp.lt.s32.totalorder %s24, 0
        %s292 = scalar_select %p291, %s24, 0
        %s293 = sadd.s32 %s292, %s290
        %s294 = smul.addr %s288, 6
        %s295 = sadd.s32 %s293, %s294
        %s296 = smul.addr %s295, 8
        %s297 = scalar_lea.vmem %s2, %s296
        %s298 = sadd.s32 %s23, 4
        %p299 = scmp.eq.s32.totalorder %s24, 0
        // Predicated region
        $region33: #{tpu_custom_call.1} parent=31 // pred_check
          %p300 = pneg %p299
        $region34: #{tpu_custom_call.1} parent=31 // pred_check_branch
          %302 = sbr.rel (%p300) target = $region36
        $region35: #{tpu_custom_call.1} parent=31 // pred_region
          %vm303 = vcmask 122880
          %304 = vst.msk [vmem:[#allocation3] sm:$0x1] %vm303, -inf
          %305 = vst.msk [vmem:[#allocation4] sm:$0x1] %vm303, 0.0
          %vm306 = vcmask 130048
          %307 = vst.msk [vmem:[#allocation2] sm:$0xff] %vm306, 0.0
        $region36: #{tpu_custom_call.1} parent=31 // pred_fallthru
          _
        %v308 = vld [vmem:[%s272] sm:$0xff]
        %v309 = vmul.f32 %v308, 0.35355338
        %v310 = vld [vmem:[%s284] sm:$0xff]
        %v311 = vld [vmem:[%s297] sm:$0xff]
        %312 = vxpose.xlu0.b32.start [1/16] %v310, 128
        %313 = vxpose.xlu0.b32.cont [2/16] 0.0, 128
        %314 = vxpose.xlu0.b32.cont [3/16] 0.0, 128
        %315 = vxpose.xlu0.b32.cont [4/16] 0.0, 128
        %316 = vxpose.xlu0.b32.cont [5/16] 0.0, 128
        %317 = vxpose.xlu0.b32.cont [6/16] 0.0, 128
        %318 = vxpose.xlu0.b32.cont [7/16] 0.0, 128
        %319 = vxpose.xlu0.b32.cont [8/16] 0.0, 128
        %320 = vxpose.xlu0.b32.cont [9/16] 0.0, 128
        %321 = vxpose.xlu0.b32.cont [10/16] 0.0, 128
        %322 = vxpose.xlu0.b32.cont [11/16] 0.0, 128
        %323 = vxpose.xlu0.b32.cont [12/16] 0.0, 128
        %324 = vxpose.xlu0.b32.cont [13/16] 0.0, 128
        %325 = vxpose.xlu0.b32.cont [14/16] 0.0, 128
        %326 = vxpose.xlu0.b32.cont [15/16] 0.0, 128
        %327 = vxpose.xlu0.b32.end [16/16] 0.0, 128
        %v328 = vpop.trf.xlu0
        %v329 = vpop.trf.xlu0
        %v330 = vpop.trf.xlu0
        %v331 = vpop.trf.xlu0
        %v332 = vpop.trf.xlu0
        %v333 = vpop.trf.xlu0
        %v334 = vpop.trf.xlu0
        %v335 = vpop.trf.xlu0
        %v336 = vpop.trf.xlu0
        %v337 = vpop.trf.xlu0
        %v338 = vpop.trf.xlu0
        %v339 = vpop.trf.xlu0
        %v340 = vpop.trf.xlu0
        %v341 = vpop.trf.xlu0
        %v342 = vpop.trf.xlu0
        %v343 = vpop.trf.xlu0
        %vm344 = vcmask 64512
        %v346 = vsel %vm344, %v328, 0
        %v349 = vsel %vm344, %v329, 0
        %351 = vmatprep.subr.mxu0 0.0
        %352 = vmatpush1.msra.mxu0 %v309
        %353 = vmatprep.subr.mxu0 0.0
        %354 = vmatpush1.msra.mxu0 0.0
        %355 = vmatprep.subr.mxu0 0.0
        %356 = vmatpush1.msra.mxu0 0.0
        %357 = vmatprep.subr.mxu0 0.0
        %358 = vmatpush1.msra.mxu0 0.0
        %359 = vmatprep.subr.mxu0 0.0
        %360 = vmatpush1.msra.mxu0 0.0
        %361 = vmatprep.subr.mxu0 0.0
        %362 = vmatpush1.msra.mxu0 0.0
        %363 = vmatprep.subr.mxu0 0.0
        %364 = vmatpush1.msra.mxu0 0.0
        %365 = vmatprep.subr.mxu0 0.0
        %366 = vmatpush1.msra.mxu0 0.0
        %367 = vmatprep.subr.mxu0 0.0
        %368 = vmatpush1.msra.mxu0 0.0
        %369 = vmatprep.subr.mxu0 0.0
        %370 = vmatpush1.msra.mxu0 0.0
        %371 = vmatprep.subr.mxu0 0.0
        %372 = vmatpush1.msra.mxu0 0.0
        %373 = vmatprep.subr.mxu0 0.0
        %374 = vmatpush1.msra.mxu0 0.0
        %375 = vmatprep.subr.mxu0 0.0
        %376 = vmatpush1.msra.mxu0 0.0
        %377 = vmatprep.subr.mxu0 0.0
        %378 = vmatpush1.msra.mxu0 0.0
        %379 = vmatprep.subr.mxu0 0.0
        %380 = vmatpush1.msra.mxu0 0.0
        %381 = vmatprep.subr.mxu0 0.0
        %382 = vmatpush1.msra.mxu0 0.0
        %383 = vmatprep.subr.mxu0 0.0
        %384 = vmatpush1.msra.mxu0 0.0
        %385 = vmatprep.subr.mxu0 0.0
        %386 = vmatpush1.msra.mxu0 0.0
        %387 = vmatprep.subr.mxu0 0.0
        %388 = vmatpush1.msra.mxu0 0.0
        %389 = vmatprep.subr.mxu0 0.0
        %390 = vmatpush1.msra.mxu0 0.0
        %391 = vmatprep.subr.mxu0 0.0
        %392 = vmatpush1.msra.mxu0 0.0
        %393 = vmatprep.subr.mxu0 0.0
        %394 = vmatpush1.msra.mxu0 0.0
        %395 = vmatprep.subr.mxu0 0.0
        %396 = vmatpush1.msra.mxu0 0.0
        %397 = vmatprep.subr.mxu0 0.0
        %398 = vmatpush1.msra.mxu0 0.0
        %399 = vmatprep.subr.mxu0 0.0
        %400 = vmatpush1.msra.mxu0 0.0
        %401 = vmatprep.subr.mxu0 0.0
        %402 = vmatpush1.msra.mxu0 0.0
        %403 = vmatprep.subr.mxu0 0.0
        %404 = vmatpush1.msra.mxu0 0.0
        %405 = vmatprep.subr.mxu0 0.0
        %406 = vmatpush1.msra.mxu0 0.0
        %407 = vmatprep.subr.mxu0 0.0
        %408 = vmatpush1.msra.mxu0 0.0
        %409 = vmatprep.subr.mxu0 0.0
        %410 = vmatpush1.msra.mxu0 0.0
        %411 = vmatprep.subr.mxu0 0.0
        %412 = vmatpush1.msra.mxu0 0.0
        %413 = vmatprep.subr.mxu0 0.0
        %414 = vmatpush1.msra.mxu0 0.0
        %415 = vmatprep.mubr.f32.mxu0 0.0
        %416 = vmatmul.mubr.f32.gmra.mrb[0].mxu0 %v346
        %v417 = vpop.f32.mrb[0].mxu0
        %v418 = vadd.f32 0.0, %v417
        %v419 = vpop.f32.mrb[0].mxu0
        %420 = vmatprep.mubr.f32.mxu0 0.0
        %421 = vmatmul.mubr.f32.gmra.mrb[0].mxu0 %v349
        %v422 = vpop.f32.mrb[0].mxu0
        %v423 = vadd.f32 0.0, %v422
        %v424 = vpop.f32.mrb[0].mxu0
        %425 = vdwg.mxu0
        %v426 = vld [vmem:[#allocation3] sm:$0x1]
        %vm427 = vcmask 130048
        %v428 = vsel %vm427, %v418, -inf
        %v429 = vsel %vm427, %v423, -inf
        %v430 = vmax.f32 %v428, %v429
        %v431 = vrot.slane %v430, 4
        %v432 = vmax.f32 %v430, %v431
        %v433 = vrot.slane %v432, 2
        %v434 = vmax.f32 %v432, %v433
        %v435 = vrot.slane %v434, 1
        %v436 = vmax.f32 %v434, %v435
        %v437 = vmax.f32 %v426, %v436
        %v438 = vsub.f32 %v426, %v437
        %v439 = vmul.f32 %v438, 1.442695
        %v440 = vpow.pop %v439
        %v442 = vlaneseq
        %v443 = vshrl.u32 %v442, 7
        %v444 = vsub.s32 0, %v443
        %v445 = vrot.slane %v437, %v444
        %v447 = vsub.f32 %v418, %v445
        %v448 = vsub.f32 %v423, %v445
        %v449 = vmul.f32 %v447, 1.442695
        %v450 = vpow.pop %v449
        %v451 = vmul.f32 %v448, 1.442695
        %v452 = vpow.pop %v451
        %v453 = vld [vmem:[#allocation4] sm:$0x1]
        %v454 = vmul.f32 %v440, %v453
        %v455 = vsel %vm427, %v450, 0.0
        %v456 = vsel %vm427, %v452, 0.0
        %v457 = vadd.f32 %v455, %v456
        %v458 = vrot.slane %v457, 4
        %v459 = vadd.f32 %v457, %v458
        %v460 = vrot.slane %v459, 2
        %v461 = vadd.f32 %v459, %v460
        %v462 = vrot.slane %v461, 1
        %v463 = vadd.f32 %v461, %v462
        %v464 = vadd.f32 %v454, %v463
        %vm465 = vcmask 122880
        %466 = vst.msk [vmem:[#allocation4] sm:$0x1] %vm465, %v464
        %v468 = vsel %vm427, %v311, 0
        %470 = vmatprep.subr.mxu0 0.0
        %471 = vmatpush1.msra.mxu0 %v450
        %472 = vmatprep.subr.mxu0 0.0
        %473 = vmatpush1.msra.mxu0 %v452
        %474 = vmatprep.subr.mxu0 0.0
        %475 = vmatpush1.msra.mxu0 0.0
        %476 = vmatprep.subr.mxu0 0.0
        %477 = vmatpush1.msra.mxu0 0.0
        %478 = vmatprep.subr.mxu0 0.0
        %479 = vmatpush1.msra.mxu0 0.0
        %480 = vmatprep.subr.mxu0 0.0
        %481 = vmatpush1.msra.mxu0 0.0
        %482 = vmatprep.subr.mxu0 0.0
        %483 = vmatpush1.msra.mxu0 0.0
        %484 = vmatprep.subr.mxu0 0.0
        %485 = vmatpush1.msra.mxu0 0.0
        %486 = vmatprep.subr.mxu0 0.0
        %487 = vmatpush1.msra.mxu0 0.0
        %488 = vmatprep.subr.mxu0 0.0
        %489 = vmatpush1.msra.mxu0 0.0
        %490 = vmatprep.subr.mxu0 0.0
        %491 = vmatpush1.msra.mxu0 0.0
        %492 = vmatprep.subr.mxu0 0.0
        %493 = vmatpush1.msra.mxu0 0.0
        %494 = vmatprep.subr.mxu0 0.0
        %495 = vmatpush1.msra.mxu0 0.0
        %496 = vmatprep.subr.mxu0 0.0
        %497 = vmatpush1.msra.mxu0 0.0
        %498 = vmatprep.subr.mxu0 0.0
        %499 = vmatpush1.msra.mxu0 0.0
        %500 = vmatprep.subr.mxu0 0.0
        %501 = vmatpush1.msra.mxu0 0.0
        %502 = vmatprep.subr.mxu0 0.0
        %503 = vmatpush1.msra.mxu0 0.0
        %504 = vmatprep.subr.mxu0 0.0
        %505 = vmatpush1.msra.mxu0 0.0
        %506 = vmatprep.subr.mxu0 0.0
        %507 = vmatpush1.msra.mxu0 0.0
        %508 = vmatprep.subr.mxu0 0.0
        %509 = vmatpush1.msra.mxu0 0.0
        %510 = vmatprep.subr.mxu0 0.0
        %511 = vmatpush1.msra.mxu0 0.0
        %512 = vmatprep.subr.mxu0 0.0
        %513 = vmatpush1.msra.mxu0 0.0
        %514 = vmatprep.subr.mxu0 0.0
        %515 = vmatpush1.msra.mxu0 0.0
        %516 = vmatprep.subr.mxu0 0.0
        %517 = vmatpush1.msra.mxu0 0.0
        %518 = vmatprep.subr.mxu0 0.0
        %519 = vmatpush1.msra.mxu0 0.0
        %520 = vmatprep.subr.mxu0 0.0
        %521 = vmatpush1.msra.mxu0 0.0
        %522 = vmatprep.subr.mxu0 0.0
        %523 = vmatpush1.msra.mxu0 0.0
        %524 = vmatprep.subr.mxu0 0.0
        %525 = vmatpush1.msra.mxu0 0.0
        %526 = vmatprep.subr.mxu0 0.0
        %527 = vmatpush1.msra.mxu0 0.0
        %528 = vmatprep.subr.mxu0 0.0
        %529 = vmatpush1.msra.mxu0 0.0
        %530 = vmatprep.subr.mxu0 0.0
        %531 = vmatpush1.msra.mxu0 0.0
        %532 = vmatprep.subr.mxu0 0.0
        %533 = vmatpush1.msra.mxu0 0.0
        %534 = vmatprep.mubr.f32.mxu0 0.0
        %535 = vmatmul.mubr.f32.gmra.mrb[0].mxu0 %v468
        %v536 = vpop.f32.mrb[0].mxu0
        %v537 = vadd.f32 0.0, %v536
        %v538 = vpop.f32.mrb[0].mxu0
        %539 = vdwg.mxu0
        %v540 = vld [vmem:[#allocation2] sm:$0xff]
        %v542 = vlaneseq
        %v543 = vshrl.u32 %v542, 7
        %v544 = vsub.s32 0, %v543
        %v545 = vrot.slane %v440, %v544
        %v547 = vmul.f32 %v545, %v540
        %v548 = vadd.f32 %v547, %v537
        %549 = vst.msk [vmem:[#allocation2] sm:$0xff] %vm427, %v548
        %550 = vst.msk [vmem:[#allocation3] sm:$0x1] %vm465, %v437
        // Predicated region
        $region37: #{tpu_custom_call.1} parent=31 // pred_check
          %p551 = pneg %p299
        $region38: #{tpu_custom_call.1} parent=31 // pred_check_branch
          %553 = sbr.rel (%p551) target = $region40
        $region39: #{tpu_custom_call.1} parent=31 // pred_region
          %v554 = vld [vmem:[#allocation4] sm:$0x1]
          %v555 = vld [vmem:[#allocation2] sm:$0xff]
          %v556 = vrcp.pop %v554
          %v558 = vlaneseq
          %v559 = vshrl.u32 %v558, 7
          %v560 = vsub.s32 0, %v559
          %v561 = vrot.slane %v556, %v560
          %v563 = vmul.f32 %v555, %v561
          %564 = vst.msk [vmem:[%s264] sm:$0xff] %vm427, %v563
        $region40: #{tpu_custom_call.1} parent=31 // pred_fallthru
          _
        %s565 = sand.u32 %s138, 1
        %s566 = scalar_lea.sflag [#allocation6], %s565
        %s567 = sand.u32 %s138, 1
        %s568 = smul.addr %s567, 8
        %s569 = scalar_lea.vmem [#allocation5], %s568
        // Predicated region
        $region41: #{tpu_custom_call.1} parent=31 // pred_check
          %p570 = pneg %p148
        $region42: #{tpu_custom_call.1} parent=31 // pred_check_branch
          %572 = sbr.rel (%p570) target = $region44
        $region43: #{tpu_custom_call.1} parent=31 // pred_region
          %s574 = ssub.s32 128, 128
          %575 = vsyncadd %s566, %s574
          %s576 = smul.addr %s22, 2
          %s577 = sadd.s32 %s23, %s576
          %s578 = smul.addr %s577, 128
          %s579 = scalar_lea.hbm %s3, %s578
          %s581 = sshll.u32 %s569, 4
          %s582 = int_to_ptr.vmem [resolvable:$true] %s581
          %584 = dma.vmem_to_hbm [thread:$0]  %s582, 128, %s579, %s566
        $region44: #{tpu_custom_call.1} parent=31 // pred_fallthru
          _
      $region32: #{tpu_custom_call.1} parent=5 // pred_fallthru
        _
      %p585 = scmp.le.s32.totalorder 2, %s12
      // Predicated region
      $region45: #{tpu_custom_call.1} parent=5 // pred_check
        %p586 = pneg %p585
      $region46: #{tpu_custom_call.1} parent=5 // pred_check_branch
        %588 = sbr.rel (%p586) target = $region48
      $region47: #{tpu_custom_call.1} parent=5 // pred_region
        %s589 = ssub.s32 %s12, 2
        // Predicated region
        $region49: #{tpu_custom_call.1} parent=47 // pred_check
          %p590 = pneg %p154
        $region50: #{tpu_custom_call.1} parent=47 // pred_check_branch
          %592 = sbr.rel (%p590) target = $region52
        $region51: #{tpu_custom_call.1} parent=47 // pred_region
          %s593 = sand.u32 %s139, 1
          %s594 = scalar_lea.sflag [#allocation6], %s593
          %s595 = sand.u32 %s139, 1
          %s596 = smul.addr %s595, 8
          %s597 = scalar_lea.vmem [#allocation5], %s596
          %598 = dma.done %s594, 128
        $region52: #{tpu_custom_call.1} parent=47 // pred_fallthru
          _
      $region48: #{tpu_custom_call.1} parent=5 // pred_fallthru
        _
    $region6: #{tpu_custom_call.1} parent=1 // loop_footer
      %s16 = sadd.s32 1, %s12
    $region7: #{tpu_custom_call.1} parent=1 // loop_footer_branch
      %11 = sbr.rel target = $region3
    $region8: #{tpu_custom_call.1} parent=1 // loop_exit
      _
    %599 = vsyncpa [#allocation6], 1
    %s600 = scalar_lea.sflag [#allocation6], 1
    %601 = vsyncpa %s600, 1

</llo_original>
